<compile_context>
chip_gen: v6e
topology: v6e:2x2x1
jax: 0.10.0
libtpu: 0.0.40
codegen_flags: <defaults>
</compile_context>

<pallas_src>
import jax
import jax.numpy as jnp
from jax.experimental import pallas as pl
from jax.experimental.pallas import tpu as pltpu


def _transition_block_kernel(x_ref, w_ref, o_ref):
    # x_ref : (4, TH, Wp, C)    four 2x2 pooling phases as contiguous slabs
    # w_ref : (C, OUTC)         1x1 conv weight, (in, out)
    # o_ref : (1, TH, Wp, OUTC)
    a = x_ref[0]
    b = x_ref[1]
    c = x_ref[2]
    d = x_ref[3]
    # ---- MaxPool2d(2,2): plain elementwise max over contiguous phase slabs (VPU only) ----
    pooled = jnp.maximum(jnp.maximum(a, b), jnp.maximum(c, d))  # (TH, Wp, C)

    th, wp, cin = pooled.shape
    # ---- 1x1 conv (no bias) == channel matmul on the MXU, f32 accumulate ----
    flat = pooled.reshape(th * wp, cin)
    out = jnp.dot(flat, w_ref[...], preferred_element_type=jnp.float32)
    o_ref[0] = out.reshape(th, wp, -1).astype(o_ref.dtype)


def _pick_tile_rows(hp, wp, cin, outc, itemsize, budget_bytes=20 << 20):
    """Largest divisor of hp whose double-buffered in+out tiles fit the VMEM budget."""
    per_row = (4 * wp * cin + wp * outc) * itemsize      # one pooled row: input + output bytes
    max_rows = max(1, budget_bytes // (2 * per_row))     # x2 for double buffering
    th = int(min(hp, max_rows))
    for t in range(th, 0, -1):
        if hp % t == 0:
            return t
    return 1


def conv2d_transition_block(x_nchw, weight_oi):
    """x_nchw: (N, C, H, W); weight_oi: (outC, inC) from nn.Conv2d(inC, outC, 1, bias=False)."""
    n, cin, h, w = x_nchw.shape
    outc = weight_oi.shape[0]
    assert h % 2 == 0 and w % 2 == 0, "spatial dims must be even for MaxPool2d(2,2)"
    hp, wp = h // 2, w // 2

    # Fuse NCHW->NHWC with 2x2 pooling-phase extraction into a single XLA transpose:
    #   (N,C,H,W) -> (N,C,Hp,2,Wp,2) -> (N,2,2,Hp,Wp,C) -> (N*4,Hp,Wp,C)
    # Phase order along the leading axis is (dh, dw) = (0,0),(0,1),(1,0),(1,1).
    x_phased = x_nchw.reshape(n, cin, hp, 2, wp, 2)
    x_phased = jnp.transpose(x_phased, (0, 3, 5, 2, 4, 1))
    x_phased = x_phased.reshape(n * 4, hp, wp, cin)

    w_io = jnp.transpose(weight_oi, (1, 0)).astype(x_nchw.dtype)   # (inC, outC)

    itemsize = jnp.dtype(x_nchw.dtype).itemsize
    th = _pick_tile_rows(hp, wp, cin, outc, itemsize)
    n_htiles = hp // th

    # Advisory cost estimate so XLA can overlap the surrounding transposes.
    flops = 2 * n * hp * wp * cin * outc + 3 * n * hp * wp * cin
    bytes_accessed = (n * 4 * hp * wp * cin * itemsize
                      + n * hp * wp * outc * itemsize
                      + cin * outc * itemsize)
    cost = pl.CostEstimate(flops=flops, transcendentals=0,
                           bytes_accessed=bytes_accessed)

    out_nhwc = pl.pallas_call(
        _transition_block_kernel,
        out_shape=jax.ShapeDtypeStruct((n, hp, wp, outc), x_nchw.dtype),
        grid_spec=pltpu.PrefetchScalarGridSpec(
            num_scalar_prefetch=0,
            grid=(n, n_htiles),
            in_specs=[
                # block of 4 along the leading axis == the 4 phases of batch element i;
                # pooled rows [j*th, (j+1)*th) along the spatial tile axis.
                pl.BlockSpec((4, th, wp, cin), lambda i, j: (i, j, 0, 0)),
                pl.BlockSpec((cin, outc), lambda i, j: (0, 0)),
            ],
            out_specs=pl.BlockSpec((1, th, wp, outc), lambda i, j: (i, j, 0, 0)),
        ),
        compiler_params=pltpu.CompilerParams(
            dimension_semantics=("parallel", "parallel"),
            vmem_limit_bytes=32 << 20,
        ),
        cost_estimate=cost,
    )(x_phased, w_io)

    # TODO(synk): if downstream consumers accept NHWC, drop this exit transpose
    # (it is a full HBM read+write of the output tensor).
    return jnp.transpose(out_nhwc, (0, 3, 1, 2))          # NHWC -> NCHW


def _reference(x_nchw, weight_oi):
    """Pure-JAX reference matching the PyTorch forward."""
    n, c, h, w = x_nchw.shape
    pooled = jnp.max(x_nchw.reshape(n, c, h // 2, 2, w // 2, 2), axis=(3, 5))
    # 1x1 conv, no bias: out[n,o,h,w] = sum_c W[o,c] * pooled[n,c,h,w]
    return jnp.einsum("oc,nchw->nohw", weight_oi, pooled)


if __name__ == "__main__":
    key = jax.random.PRNGKey(0)
    k_x, k_w = jax.random.split(key)

    N, inC, H, W = 2, 4, 16, 16
    outC = 8

    x = jax.random.normal(k_x, (N, inC, H, W), dtype=jnp.float32)
    # nn.Conv2d(inC, outC, 1, bias=False) weight shape is (outC, inC, 1, 1);
    # we carry it as (outC, inC).
    weight = jax.random.normal(k_w, (outC, inC), dtype=jnp.float32) * 0.1

    out = conv2d_transition_block(x, weight)
    out = jax.block_until_ready(out)

    ref = _reference(x, weight)
    assert out.shape == (N, outC, H // 2, W // 2), out.shape
    assert jnp.allclose(out, ref, atol=1e-5, rtol=1e-5), "mismatch vs reference"

    print("KERNEL_OK")
</pallas_src>

<mosaic_0001>
module attributes {stable_mosaic.version = 11 : i64} {
  func.func @_transition_block_kernel(%arg0: i32, %arg1: i32, %arg2: memref<4x8x8x4xf32, #tpu.memory_space<vmem>>, %arg3: memref<4x8xf32, #tpu.memory_space<vmem>>, %arg4: memref<1x8x8x8xf32, #tpu.memory_space<vmem>>) attributes {dimension_semantics = [#tpu.dimension_semantics<parallel>, #tpu.dimension_semantics<parallel>], iteration_bounds = array<i64: 2, 1>, scalar_prefetch = 0 : i64, scratch_operands = 0 : i64, tpu.core_type = #tpu.core_type<tc>, window_params = [{transform_indices = @transform_0, window_bounds = array<i64: 4, 8, 8, 4>}, {pipeline_mode = #tpu.pipeline_mode<synchronous>, transform_indices = @transform_1, window_bounds = array<i64: 4, 8>}, {transform_indices = @transform_2, window_bounds = array<i64: 1, 8, 8, 8>}]} {
    %c0 = arith.constant 0 : index
    %c0_0 = arith.constant 0 : index
    %c0_1 = arith.constant 0 : index
    %c0_2 = arith.constant 0 : index
    %0 = vector.load %arg2[%c0, %c0_0, %c0_1, %c0_2] : memref<4x8x8x4xf32, #tpu.memory_space<vmem>>, vector<1x8x8x4xf32>
    %1 = vector.shape_cast %0 : vector<1x8x8x4xf32> to vector<8x8x4xf32>
    %c1 = arith.constant 1 : index
    %c0_3 = arith.constant 0 : index
    %c0_4 = arith.constant 0 : index
    %c0_5 = arith.constant 0 : index
    %2 = vector.load %arg2[%c1, %c0_3, %c0_4, %c0_5] : memref<4x8x8x4xf32, #tpu.memory_space<vmem>>, vector<1x8x8x4xf32>
    %3 = vector.shape_cast %2 : vector<1x8x8x4xf32> to vector<8x8x4xf32>
    %c2 = arith.constant 2 : index
    %c0_6 = arith.constant 0 : index
    %c0_7 = arith.constant 0 : index
    %c0_8 = arith.constant 0 : index
    %4 = vector.load %arg2[%c2, %c0_6, %c0_7, %c0_8] : memref<4x8x8x4xf32, #tpu.memory_space<vmem>>, vector<1x8x8x4xf32>
    %5 = vector.shape_cast %4 : vector<1x8x8x4xf32> to vector<8x8x4xf32>
    %c3 = arith.constant 3 : index
    %c0_9 = arith.constant 0 : index
    %c0_10 = arith.constant 0 : index
    %c0_11 = arith.constant 0 : index
    %6 = vector.load %arg2[%c3, %c0_9, %c0_10, %c0_11] : memref<4x8x8x4xf32, #tpu.memory_space<vmem>>, vector<1x8x8x4xf32>
    %7 = vector.shape_cast %6 : vector<1x8x8x4xf32> to vector<8x8x4xf32>
    %8 = arith.maximumf %1, %3 : vector<8x8x4xf32>
    %9 = arith.maximumf %5, %7 : vector<8x8x4xf32>
    %10 = arith.maximumf %8, %9 : vector<8x8x4xf32>
    %11 = vector.shape_cast %10 : vector<8x8x4xf32> to vector<64x4xf32>
    %c0_12 = arith.constant 0 : index
    %c0_13 = arith.constant 0 : index
    %12 = vector.load %arg3[%c0_12, %c0_13] : memref<4x8xf32, #tpu.memory_space<vmem>>, vector<4x8xf32>
    %cst = arith.constant dense<0.000000e+00> : vector<64x8xf32>
    %13 = tpu.matmul %11, %12, %cst {dimension_numbers = #tpu.dot_dimension_numbers<[1], [0], [0], [1], [0, 0, 1, 1], [], []>} : vector<64x4xf32>, vector<4x8xf32>, vector<64x8xf32> -> vector<64x8xf32>
    %14 = vector.shape_cast %13 : vector<64x8xf32> to vector<8x8x8xf32>
    %c0_14 = arith.constant 0 : index
    %c0_15 = arith.constant 0 : index
    %c0_16 = arith.constant 0 : index
    %c0_17 = arith.constant 0 : index
    %15 = vector.load %arg4[%c0_14, %c0_15, %c0_16, %c0_17] : memref<1x8x8x8xf32, #tpu.memory_space<vmem>>, vector<1x8x8x8xf32>
    %16 = vector.shape_cast %15 : vector<1x8x8x8xf32> to vector<8x8x8xf32>
    %17 = vector.shape_cast %14 : vector<8x8x8xf32> to vector<1x8x8x8xf32>
    tpu.vector_store %arg4[%c0_14, %c0_15, %c0_16, %c0_17], %17 {strides = array<i32>} : memref<1x8x8x8xf32, #tpu.memory_space<vmem>>, vector<1x8x8x8xf32>,
    return
  }
  func.func @transform_0(%arg0: i32, %arg1: i32) -> (i32, i32, i32, i32) {
    %c0_i32 = arith.constant 0 : i32
    %c0_i32_0 = arith.constant 0 : i32
    %c0_i32_1 = arith.constant 0 : i32
    return %arg0, %arg1, %c0_i32, %c0_i32_0 : i32, i32, i32, i32
  }
  func.func @transform_1(%arg0: i32, %arg1: i32) -> (i32, i32) {
    %c0_i32 = arith.constant 0 : i32
    %c0_i32_0 = arith.constant 0 : i32
    %c0_i32_1 = arith.constant 0 : i32
    return %c0_i32, %c0_i32_0 : i32, i32
  }
  func.func @transform_2(%arg0: i32, %arg1: i32) -> (i32, i32, i32, i32) {
    %c0_i32 = arith.constant 0 : i32
    %c0_i32_0 = arith.constant 0 : i32
    %c0_i32_1 = arith.constant 0 : i32
    return %arg0, %arg1, %c0_i32, %c0_i32_0 : i32, i32, i32, i32
  }
}

</mosaic_0001>

<llo_original>
// kernel: tpu_custom_call.1
$region0: #{tpu_custom_call.1}
  #allocation0 [shape = 'u32[]', space=smem, size = 0x4, offset = 0x4, fixed_abs, tag = 'smem constant byte address 0x4 - core index']
  #allocation1 [shape = 'u32[144,128]{1,0:T(1,128)}', space=vmem, size = 0x12000, scoped, tag = 'internal scratch']
  %s0 = inlined_call_operand.vmem [shape: f32[8,8,8,4], index: 0, kind: input, shape index: {}]
  %s1 = inlined_call_operand.vmem [shape: f32[4,8], index: 1, kind: input, shape index: {}]
  %s2 = inlined_call_operand.hbm [shape: f32[2,8,8,8], index: 2, kind: output, shape index: {}]
  %s3 = sld [smem:[#allocation0]]
  $region41: #{tpu_custom_call.1} parent=0
    _
  %s5 = ssub.s32 1, %s3
  %s6 = scalar_select 0, %s5, %s3
  $region1: #{tpu_custom_call.1} parent=0
    #allocation2 [shape = 'u8[65536]{0}', space=vmem, size = 0x10000, scoped, tag = 'output window, operand 0']
    #allocation3 [shape = 's32[2]{0}', space=sflag, size = 0x8, scoped, tag = 'scoped memory for tpu_custom_call.1']
    %7 = vsyncpa [#allocation3], 0
    %s8 = scalar_lea.sflag [#allocation3], 1
    %9 = vsyncpa %s8, 0
    loop: start=0, step=1, limit=4
    $region2: #{tpu_custom_call.1} parent=1 // loop_pre_header
      _
    $region3: #{tpu_custom_call.1} parent=1 // loop_header
      %s11 = sphi 0, %s15
      %p12 = scmp.ge.s32.totalorder %s11, 4
      %s18 = sphi 0, %s30
      %s19 = sphi 0, %s26
      %s20 = sphi 0, %s18
      %s21 = sphi 0, %s19
      %s22 = sphi 0, %s20
      %s23 = sphi 0, %s21
      %s35 = sphi 0, %s37
      %s38 = sphi 0, %s35
      %s39 = sphi 0, %s38
      %s55 = sphi 0, %s39
      %s59 = sphi 0, %s59
      %s61 = sphi 0, %s59
      %s62 = sphi 0, %s61
      %s76 = sphi 0, %s62
      %s84 = sphi 0, %s86
      %s87 = sphi 0, %s84
      %s88 = sphi 0, %s87
      %s104 = sphi 0, %s88
    $region4: #{tpu_custom_call.1} parent=1 // loop_header_branch
      %14 = sbr.rel (%p12) target = $region8
    $region5: #{tpu_custom_call.1} parent=1 // loop_body
      %s16 = ssub.s32 %s11, 1
      %s17 = ssub.s32 %s11, 2
      %s24 = sadd.s32 1, %s19
      %p25 = scmp.ge.s32.totalorder %s24, 1
      %s26 = scalar_select %p25, 0, %s24
      %s27 = sadd.s32 1, %s18
      %s28 = scalar_select %p25, %s27, %s18
      %p29 = scmp.ge.s32.totalorder %s28, 2
      %s30 = scalar_select %p29, 0, %s28
      %s31 = ssub.s32 %s18, %s30
      %s32 = ssub.s32 %s19, %s26
      %s33 = sor.u32 %s31, %s32
      %p34 = scmp.eq.s32.totalorder %s33, 0
      %s36 = sadd.s32 %s35, 1
      %s37 = scalar_select %p34, %s35, %s36
      %p40 = pneg %p34
      %p41 = scmp.eq.s32.totalorder %s11, 1
      %p42 = por %p40, %p41
      %p43 = scmp.ne.s32.totalorder %s35, %s38
      %p44 = scmp.eq.s32.totalorder %s11, 0
      %p45 = por %p43, %p44
      %p46 = scmp.ne.s32.totalorder %s35, %s38
      %p47 = scmp.eq.s32.totalorder %s16, 1
      %p48 = por %p46, %p47
      %p49 = scmp.ne.s32.totalorder %s38, %s39
      %p50 = scmp.eq.s32.totalorder %s16, 0
      %p51 = por %p49, %p50
      %p52 = scmp.ne.s32.totalorder %s38, %s39
      %p53 = scmp.eq.s32.totalorder %s17, 1
      %p54 = por %p52, %p53
      %p56 = scmp.ne.s32.totalorder %s39, %s55
      %p57 = scmp.eq.s32.totalorder %s17, 0
      %p58 = por %p56, %p57
      %s60 = sadd.s32 %s59, 1
      %p63 = scmp.eq.s32.totalorder %s11, 1
      %p64 = scmp.ne.s32.totalorder %s59, %s61
      %p65 = scmp.eq.s32.totalorder %s11, 0
      %p66 = por %p64, %p65
      %p67 = scmp.ne.s32.totalorder %s59, %s61
      %p68 = scmp.eq.s32.totalorder %s16, 1
      %p69 = por %p67, %p68
      %p70 = scmp.ne.s32.totalorder %s61, %s62
      %p71 = scmp.eq.s32.totalorder %s16, 0
      %p72 = por %p70, %p71
      %p73 = scmp.ne.s32.totalorder %s61, %s62
      %p74 = scmp.eq.s32.totalorder %s17, 1
      %p75 = por %p73, %p74
      %p77 = scmp.ne.s32.totalorder %s62, %s76
      %p78 = scmp.eq.s32.totalorder %s17, 0
      %p79 = por %p77, %p78
      %s80 = ssub.s32 %s18, %s30
      %s81 = ssub.s32 %s19, %s26
      %s82 = sor.u32 %s80, %s81
      %p83 = scmp.eq.s32.totalorder %s82, 0
      %s85 = sadd.s32 %s84, 1
      %s86 = scalar_select %p83, %s84, %s85
      %p89 = pneg %p83
      %p90 = scmp.eq.s32.totalorder %s11, 1
      %p91 = por %p89, %p90
      %p92 = scmp.ne.s32.totalorder %s84, %s87
      %p93 = scmp.eq.s32.totalorder %s11, 0
      %p94 = por %p92, %p93
      %p95 = scmp.ne.s32.totalorder %s84, %s87
      %p96 = scmp.eq.s32.totalorder %s16, 1
      %p97 = por %p95, %p96
      %p98 = scmp.ne.s32.totalorder %s87, %s88
      %p99 = scmp.eq.s32.totalorder %s16, 0
      %p100 = por %p98, %p99
      %p101 = scmp.ne.s32.totalorder %s87, %s88
      %p102 = scmp.eq.s32.totalorder %s17, 1
      %p103 = por %p101, %p102
      %p105 = scmp.ne.s32.totalorder %s88, %s104
      %p106 = scmp.eq.s32.totalorder %s17, 0
      %p107 = por %p105, %p106
      %p108 = scmp.le.s32.totalorder 1, %s11
      %p109 = scmp.lt.s32.totalorder %s11, 3
      %p110 = pnand %p108, %p109
      %p111 = pneg %p110
      // Predicated region
      $region9: #{tpu_custom_call.1} parent=5 // pred_check
        _
      $region10: #{tpu_custom_call.1} parent=5 // pred_check_branch
        %113 = sbr.rel (%p110) target = $region12
      $region11: #{tpu_custom_call.1} parent=5 // pred_region
        %s114 = ssub.s32 %s11, 1
        // Predicated region
        $region13: #{tpu_custom_call.1} parent=11 // pred_check
          %p115 = pneg %p72
        $region14: #{tpu_custom_call.1} parent=11 // pred_check_branch
          %117 = sbr.rel (%p115) target = $region16
        $region15: #{tpu_custom_call.1} parent=11 // pred_region
          _
        $region16: #{tpu_custom_call.1} parent=11 // pred_fallthru
          _
      $region12: #{tpu_custom_call.1} parent=5 // pred_fallthru
        _
      %p118 = scmp.lt.s32.totalorder %s11, 2
      // Predicated region
      $region17: #{tpu_custom_call.1} parent=5 // pred_check
        %p119 = pneg %p118
      $region18: #{tpu_custom_call.1} parent=5 // pred_check_branch
        %121 = sbr.rel (%p119) target = $region20
      $region19: #{tpu_custom_call.1} parent=5 // pred_region
        // Predicated region
        $region21: #{tpu_custom_call.1} parent=19 // pred_check
          %p122 = pneg %p45
        $region22: #{tpu_custom_call.1} parent=19 // pred_check_branch
          %124 = sbr.rel (%p122) target = $region24
        $region23: #{tpu_custom_call.1} parent=19 // pred_region
          %s125 = smul.u32 4, %s18
          %s126 = smul.u32 8, %s19
          %p127 = scmp.lt.s32.totalorder %s125, 7
          %s128 = scalar_select %p127, %s125, 7
          %p129 = scmp.lt.s32.totalorder %s126, 7
          %s130 = scalar_select %p129, %s126, 7
          %s131 = smul.addr %s128, 8
          %s132 = sadd.s32 %s130, %s131
          %s133 = smul.addr %s132, 8
          %s134 = scalar_lea.vmem %s0, %s133
          %s135 = smul.u32 4, %s18
          %s136 = smul.u32 8, %s19
        $region24: #{tpu_custom_call.1} parent=19 // pred_fallthru
          _
      $region20: #{tpu_custom_call.1} parent=5 // pred_fallthru
        _
      %p137 = scmp.le.s32.totalorder 1, %s11
      %p138 = scmp.lt.s32.totalorder %s11, 3
      %p139 = pnand %p137, %p138
      %p140 = pneg %p139
      // Predicated region
      $region25: #{tpu_custom_call.1} parent=5 // pred_check
        _
      $region26: #{tpu_custom_call.1} parent=5 // pred_check_branch
        %142 = sbr.rel (%p139) target = $region28
      $region27: #{tpu_custom_call.1} parent=5 // pred_region
        %s143 = ssub.s32 %s11, 1
        %s144 = smul.u32 4, %s20
        %s145 = smul.u32 8, %s21
        %p146 = scmp.lt.s32.totalorder %s144, 7
        %s147 = scalar_select %p146, %s144, 7
        %p148 = scmp.lt.s32.totalorder %s145, 7
        %s149 = scalar_select %p148, %s145, 7
        %s150 = smul.addr %s147, 8
        %s151 = sadd.s32 %s149, %s150
        %s152 = smul.addr %s151, 8
        %s153 = scalar_lea.vmem %s0, %s152
        %p154 = pneg %p51
        %p155 = pneg %p48
        %p156 = pneg %p72
        %p157 = pneg %p69
        %p158 = pneg %p100
        %p159 = pneg %p97
        %s160 = sand.u32 %s87, 1
        %s161 = scalar_lea.sflag [#allocation3], %s160
        %s162 = sand.u32 %s87, 1
        %s163 = smul.addr %s162, 64
        %s164 = scalar_lea.vmem [#allocation2], %s163
        %s165 = smul.u32 4, %s20
        %s166 = smul.u32 8, %s21
        %p167 = scmp.lt.s32.totalorder %s165, 7
        %s168 = scalar_select %p167, %s165, 7
        %p169 = scmp.lt.s32.totalorder %s166, 7
        %s170 = scalar_select %p169, %s166, 7
        %s171 = smul.addr %s168, 8
        %s172 = sadd.s32 %s170, %s171
        %s173 = smul.addr %s172, 8
        %s174 = scalar_lea.vmem %s0, %s173
        %s175 = smul.u32 4, %s20
        %s176 = smul.u32 8, %s21
        %s177 = smul.u32 8, %s21
        %v178 = vld [vmem:[%s174] sm:$0xff]
        %v179 = vld [vmem:[%s174 + $0x8] sm:$0xff]
        %v180 = vld [vmem:[%s174 + $0x10] sm:$0xff]
        %v181 = vld [vmem:[%s174 + $0x18] sm:$0xff]
        %v182 = vld [vmem:[%s174 + $0x20] sm:$0xff]
        %v183 = vld [vmem:[%s174 + $0x28] sm:$0xff]
        %v184 = vld [vmem:[%s174 + $0x30] sm:$0xff]
        %v185 = vld [vmem:[%s174 + $0x38] sm:$0xff]
        %s186 = scalar_lea.vmem %s174, 64
        %v187 = vld [vmem:[%s186] sm:$0xff]
        %v188 = vld [vmem:[%s186 + $0x8] sm:$0xff]
        %v189 = vld [vmem:[%s186 + $0x10] sm:$0xff]
        %v190 = vld [vmem:[%s186 + $0x18] sm:$0xff]
        %v191 = vld [vmem:[%s186 + $0x20] sm:$0xff]
        %v192 = vld [vmem:[%s186 + $0x28] sm:$0xff]
        %v193 = vld [vmem:[%s186 + $0x30] sm:$0xff]
        %v194 = vld [vmem:[%s186 + $0x38] sm:$0xff]
        %s195 = scalar_lea.vmem %s174, 128
        %v196 = vld [vmem:[%s195] sm:$0xff]
        %v197 = vld [vmem:[%s195 + $0x8] sm:$0xff]
        %v198 = vld [vmem:[%s195 + $0x10] sm:$0xff]
        %v199 = vld [vmem:[%s195 + $0x18] sm:$0xff]
        %v200 = vld [vmem:[%s195 + $0x20] sm:$0xff]
        %v201 = vld [vmem:[%s195 + $0x28] sm:$0xff]
        %v202 = vld [vmem:[%s195 + $0x30] sm:$0xff]
        %v203 = vld [vmem:[%s195 + $0x38] sm:$0xff]
        %s204 = scalar_lea.vmem %s174, 192
        %v205 = vld [vmem:[%s204] sm:$0xff]
        %v206 = vld [vmem:[%s204 + $0x8] sm:$0xff]
        %v207 = vld [vmem:[%s204 + $0x10] sm:$0xff]
        %v208 = vld [vmem:[%s204 + $0x18] sm:$0xff]
        %v209 = vld [vmem:[%s204 + $0x20] sm:$0xff]
        %v210 = vld [vmem:[%s204 + $0x28] sm:$0xff]
        %v211 = vld [vmem:[%s204 + $0x30] sm:$0xff]
        %v212 = vld [vmem:[%s204 + $0x38] sm:$0xff]
        %v213 = vmax.f32 %v178, %v187
        %v214 = vmax.f32 %v179, %v188
        %v215 = vmax.f32 %v180, %v189
        %v216 = vmax.f32 %v181, %v190
        %v217 = vmax.f32 %v182, %v191
        %v218 = vmax.f32 %v183, %v192
        %v219 = vmax.f32 %v184, %v193
        %v220 = vmax.f32 %v185, %v194
        %v221 = vmax.f32 %v196, %v205
        %v222 = vmax.f32 %v197, %v206
        %v223 = vmax.f32 %v198, %v207
        %v224 = vmax.f32 %v199, %v208
        %v225 = vmax.f32 %v200, %v209
        %v226 = vmax.f32 %v201, %v210
        %v227 = vmax.f32 %v202, %v211
        %v228 = vmax.f32 %v203, %v212
        %v229 = vmax.f32 %v213, %v221
        %v230 = vmax.f32 %v214, %v222
        %v231 = vmax.f32 %v215, %v223
        %v232 = vmax.f32 %v216, %v224
        %v233 = vmax.f32 %v217, %v225
        %v234 = vmax.f32 %v218, %v226
        %v235 = vmax.f32 %v219, %v227
        %v236 = vmax.f32 %v220, %v228
        %v237 = vld [vmem:[%s1] sm:$0xf]
        %vm238 = vcmask 31744
        %v240 = vsel %vm238, %v229, 0
        %v243 = vsel %vm238, %v230, 0
        %v246 = vsel %vm238, %v231, 0
        %v249 = vsel %vm238, %v232, 0
        %v252 = vsel %vm238, %v233, 0
        %v255 = vsel %vm238, %v234, 0
        %v258 = vsel %vm238, %v235, 0
        %v261 = vsel %vm238, %v236, 0
        %vm263 = vcmask 1043456
        %v265 = vsel %vm263, %v237, 0
        %267 = vmatprep.subr.mxu0 0.0
        %268 = vmatpush1.msra.mxu0 0.0
        %269 = vmatprep.subr.mxu0 0.0
        %270 = vmatpush1.msra.mxu0 0.0
        %271 = vmatprep.subr.mxu0 0.0
        %272 = vmatpush1.msra.mxu0 0.0
        %273 = vmatprep.subr.mxu0 0.0
        %274 = vmatpush1.msra.mxu0 0.0
        %275 = vmatprep.subr.mxu0 0.0
        %276 = vmatpush1.msra.mxu0 0.0
        %277 = vmatprep.subr.mxu0 0.0
        %278 = vmatpush1.msra.mxu0 0.0
        %279 = vmatprep.subr.mxu0 0.0
        %280 = vmatpush1.msra.mxu0 0.0
        %281 = vmatprep.subr.mxu0 0.0
        %282 = vmatpush1.msra.mxu0 0.0
        %283 = vmatprep.subr.mxu0 0.0
        %284 = vmatpush1.msra.mxu0 0.0
        %285 = vmatprep.subr.mxu0 0.0
        %286 = vmatpush1.msra.mxu0 0.0
        %287 = vmatprep.subr.mxu0 0.0
        %288 = vmatpush1.msra.mxu0 0.0
        %289 = vmatprep.subr.mxu0 0.0
        %290 = vmatpush1.msra.mxu0 0.0
        %291 = vmatprep.subr.mxu0 0.0
        %292 = vmatpush1.msra.mxu0 0.0
        %293 = vmatprep.subr.mxu0 0.0
        %294 = vmatpush1.msra.mxu0 0.0
        %295 = vmatprep.subr.mxu0 0.0
        %296 = vmatpush1.msra.mxu0 0.0
        %297 = vmatprep.subr.mxu0 0.0
        %298 = vmatpush1.msra.mxu0 %v265
        %299 = vmatprep.subr.mxu0 0.0
        %300 = vmatpush2.msra.mxu0 0.0
        %301 = vmatprep.subr.mxu0 0.0
        %302 = vmatpush2.msra.mxu0 0.0
        %303 = vmatprep.subr.mxu0 0.0
        %304 = vmatpush2.msra.mxu0 0.0
        %305 = vmatprep.subr.mxu0 0.0
        %306 = vmatpush2.msra.mxu0 0.0
        %307 = vmatprep.subr.mxu0 0.0
        %308 = vmatpush2.msra.mxu0 0.0
        %309 = vmatprep.subr.mxu0 0.0
        %310 = vmatpush2.msra.mxu0 0.0
        %311 = vmatprep.subr.mxu0 0.0
        %312 = vmatpush2.msra.mxu0 0.0
        %313 = vmatprep.subr.mxu0 0.0
        %314 = vmatpush2.msra.mxu0 0.0
        %315 = vmatprep.subr.mxu0 0.0
        %316 = vmatpush2.msra.mxu0 0.0
        %317 = vmatprep.subr.mxu0 0.0
        %318 = vmatpush2.msra.mxu0 0.0
        %319 = vmatprep.subr.mxu0 0.0
        %320 = vmatpush2.msra.mxu0 0.0
        %321 = vmatprep.subr.mxu0 0.0
        %322 = vmatpush2.msra.mxu0 0.0
        %323 = vmatprep.subr.mxu0 0.0
        %324 = vmatpush2.msra.mxu0 0.0
        %325 = vmatprep.subr.mxu0 0.0
        %326 = vmatpush2.msra.mxu0 0.0
        %327 = vmatprep.subr.mxu0 0.0
        %328 = vmatpush2.msra.mxu0 0.0
        %329 = vmatprep.subr.mxu0 0.0
        %330 = vmatpush2.msra.mxu0 0.0
        %331 = vmatprep.mubr.f32.mxu0 0.0
        %332 = vmatmul.mubr.f32.gmra.mxu0 %v240
        %v333 = vpop.f32.mrf.mxu0
        %v334 = vadd.f32 0.0, %v333
        %v335 = vpop.f32.mrf.mxu0
        %336 = vmatprep.mubr.f32.mxu0 0.0
        %337 = vmatmul.mubr.f32.gmra.mxu0 %v243
        %v338 = vpop.f32.mrf.mxu0
        %v339 = vadd.f32 0.0, %v338
        %v340 = vpop.f32.mrf.mxu0
        %341 = vmatprep.mubr.f32.mxu0 0.0
        %342 = vmatmul.mubr.f32.gmra.mxu0 %v246
        %v343 = vpop.f32.mrf.mxu0
        %v344 = vadd.f32 0.0, %v343
        %v345 = vpop.f32.mrf.mxu0
        %346 = vmatprep.mubr.f32.mxu0 0.0
        %347 = vmatmul.mubr.f32.gmra.mxu0 %v249
        %v348 = vpop.f32.mrf.mxu0
        %v349 = vadd.f32 0.0, %v348
        %v350 = vpop.f32.mrf.mxu0
        %351 = vmatprep.mubr.f32.mxu0 0.0
        %352 = vmatmul.mubr.f32.gmra.mxu0 %v252
        %v353 = vpop.f32.mrf.mxu0
        %v354 = vadd.f32 0.0, %v353
        %v355 = vpop.f32.mrf.mxu0
        %356 = vmatprep.mubr.f32.mxu0 0.0
        %357 = vmatmul.mubr.f32.gmra.mxu0 %v255
        %v358 = vpop.f32.mrf.mxu0
        %v359 = vadd.f32 0.0, %v358
        %v360 = vpop.f32.mrf.mxu0
        %361 = vmatprep.mubr.f32.mxu0 0.0
        %362 = vmatmul.mubr.f32.gmra.mxu0 %v258
        %v363 = vpop.f32.mrf.mxu0
        %v364 = vadd.f32 0.0, %v363
        %v365 = vpop.f32.mrf.mxu0
        %366 = vmatprep.mubr.f32.mxu0 0.0
        %367 = vmatmul.mubr.f32.gmra.mxu0 %v261
        %v368 = vpop.f32.mrf.mxu0
        %v369 = vadd.f32 0.0, %v368
        %v370 = vpop.f32.mrf.mxu0
        %371 = vdwg.mxu0
        %vm372 = vcmask 64512
        %373 = vst.msk [vmem:[%s164] sm:$0xff] %vm372, %v334
        %374 = vst.msk [vmem:[%s164 + $0x8] sm:$0xff] %vm372, %v339
        %375 = vst.msk [vmem:[%s164 + $0x10] sm:$0xff] %vm372, %v344
        %376 = vst.msk [vmem:[%s164 + $0x18] sm:$0xff] %vm372, %v349
        %377 = vst.msk [vmem:[%s164 + $0x20] sm:$0xff] %vm372, %v354
        %378 = vst.msk [vmem:[%s164 + $0x28] sm:$0xff] %vm372, %v359
        %379 = vst.msk [vmem:[%s164 + $0x30] sm:$0xff] %vm372, %v364
        %380 = vst.msk [vmem:[%s164 + $0x38] sm:$0xff] %vm372, %v369
        %s381 = sand.u32 %s87, 1
        %s382 = scalar_lea.sflag [#allocation3], %s381
        %s383 = sand.u32 %s87, 1
        %s384 = smul.addr %s383, 64
        %s385 = scalar_lea.vmem [#allocation2], %s384
        // Predicated region
        $region29: #{tpu_custom_call.1} parent=27 // pred_check
          %p386 = pneg %p97
        $region30: #{tpu_custom_call.1} parent=27 // pred_check_branch
          %388 = sbr.rel (%p386) target = $region32
        $region31: #{tpu_custom_call.1} parent=27 // pred_region
          %s389 = smul.u32 8, %s21
          %s391 = ssub.s32 1024, 1024
          %392 = vsyncadd %s382, %s391
          %s393 = smul.addr %s20, 8
          %s394 = sadd.s32 %s389, %s393
          %s395 = smul.addr %s394, 128
          %s396 = scalar_lea.hbm %s2, %s395
          %s397 = sshll.u32 %s385, 4
          %s398 = int_to_ptr.vmem [resolvable:$true] %s397
          %403 = dma.vmem_to_hbm [thread:$0]  %s398, 1024, %s396, %s382, 128, 128, 8
        $region32: #{tpu_custom_call.1} parent=27 // pred_fallthru
          _
      $region28: #{tpu_custom_call.1} parent=5 // pred_fallthru
        _
      %p404 = scmp.le.s32.totalorder 2, %s11
      // Predicated region
      $region33: #{tpu_custom_call.1} parent=5 // pred_check
        %p405 = pneg %p404
      $region34: #{tpu_custom_call.1} parent=5 // pred_check_branch
        %407 = sbr.rel (%p405) target = $region36
      $region35: #{tpu_custom_call.1} parent=5 // pred_region
        %s408 = ssub.s32 %s11, 2
        // Predicated region
        $region37: #{tpu_custom_call.1} parent=35 // pred_check
          %p409 = pneg %p103
        $region38: #{tpu_custom_call.1} parent=35 // pred_check_branch
          %411 = sbr.rel (%p409) target = $region40
        $region39: #{tpu_custom_call.1} parent=35 // pred_region
          %s412 = sand.u32 %s88, 1
          %s413 = scalar_lea.sflag [#allocation3], %s412
          %s414 = sand.u32 %s88, 1
          %s415 = smul.addr %s414, 64
          %s416 = scalar_lea.vmem [#allocation2], %s415
          %417 = dma.done %s413, 1024
        $region40: #{tpu_custom_call.1} parent=35 // pred_fallthru
          _
      $region36: #{tpu_custom_call.1} parent=5 // pred_fallthru
        _
    $region6: #{tpu_custom_call.1} parent=1 // loop_footer
      %s15 = sadd.s32 1, %s11
    $region7: #{tpu_custom_call.1} parent=1 // loop_footer_branch
      %10 = sbr.rel target = $region3
    $region8: #{tpu_custom_call.1} parent=1 // loop_exit
      _
    %418 = vsyncpa [#allocation3], 1
    %s419 = scalar_lea.sflag [#allocation3], 1
    %420 = vsyncpa %s419, 1

</llo_original>
